<compile_context>
chip_gen: v7x
topology: tpu7x:2x2x1
jax: 0.10.0
libtpu: 0.0.40
codegen_flags: <defaults>
</compile_context>

<pallas_src>
import functools

import jax
import jax.numpy as jnp
from jax.experimental import pallas as pl
from jax.experimental.pallas import tpu as pltpu


def _round_up(a, b):
    return (a + b - 1) // b * b


def _vmem_capacity_bytes():
    try:
        info = pltpu.get_tpu_info()
        cap = getattr(info, "vmem_capacity_bytes", None)
        if cap:
            return int(cap)
    except Exception:
        pass
    return 64 * 1024 * 1024  # conservative fallback: v7x per-TensorCore VMEM


# ---------------------------------------------------------------------------
# One-time parameter preparation (NOT in the per-call forward path).
# ---------------------------------------------------------------------------
def prepare_classification_head_params(w1, b1, w2, b2):
    """w1: (d_ff, d_ff), b1: (d_ff,), w2: (tw, d_ff), b2: (tw,) — PyTorch layout."""
    d_ff = w1.shape[1]
    tw = w2.shape[0]
    d_ff_pad = _round_up(d_ff, 128)
    tw_pad = _round_up(tw, 128)

    # Pre-transpose to (in, out) and cast to bf16 once; zero padding is exact.
    w1t = jnp.pad(w1.T.astype(jnp.bfloat16),
                  ((0, d_ff_pad - d_ff), (0, d_ff_pad - d_ff)))
    w2t = jnp.pad(w2.T.astype(jnp.bfloat16),
                  ((0, d_ff_pad - d_ff), (0, tw_pad - tw)))
    b1p = jnp.pad(b1.astype(jnp.float32), (0, d_ff_pad - d_ff)).reshape(1, d_ff_pad)
    b2p = jnp.pad(b2.astype(jnp.float32), (0, tw_pad - tw)).reshape(1, tw_pad)
    return dict(w1t=w1t, b1=b1p, w2t=w2t, b2=b2p,
                d_ff=d_ff, tw=tw, d_ff_pad=d_ff_pad, tw_pad=tw_pad)


# ---------------------------------------------------------------------------
# Kernels
# ---------------------------------------------------------------------------
def _fused_kernel(x_ref, w1t_ref, b1_ref, w2t_ref, b2_ref, out_ref):
    """Fast path: full padded weights resident in VMEM; grid = batch tiles only.

    x_ref   : (tm, d_ff_pad)       f32
    w1t_ref : (d_ff_pad, d_ff_pad) bf16   (W1^T, resident)
    b1_ref  : (1, d_ff_pad)        f32
    w2t_ref : (d_ff_pad, tw_pad)   bf16   (W2^T, resident)
    b2_ref  : (1, tw_pad)          f32
    out_ref : (tm, tw_pad)         f32
    """
    x = x_ref[...]                                           # f32
    h = jnp.dot(x.astype(jnp.bfloat16), w1t_ref[...],
                preferred_element_type=jnp.float32)          # (tm, d_ff_pad)
    h = jnp.maximum(h + b1_ref[...], 0.0)                    # bias + ReLU (f32)
    r = (x + h).astype(jnp.bfloat16)                         # residual add in f32
    out_ref[...] = jnp.dot(r, w2t_ref[...],
                           preferred_element_type=jnp.float32) + b2_ref[...]


def _tiled_kernel(x_ref, w1t_ref, b1_ref, w2t_ref, b2_ref, out_ref, *, tj):
    """General path: feature axis tiled in blocks of tj; the f32 output block
    itself is the accumulator (resident across j — no VMEM scratch).

    x_ref   : (tm, d_ff_pad)     f32, resident across j
    w1t_ref : (d_ff_pad, tj)     bf16, column block j of W1^T
    b1_ref  : (1, d_ff_pad)      f32, resident
    w2t_ref : (tj, tw_pad)       bf16, row block j of W2^T
    b2_ref  : (1, tw_pad)        f32, resident
    out_ref : (tm, tw_pad)       f32, accumulator
    """
    j = pl.program_id(1)

    @pl.when(j == 0)
    def _():
        out_ref[...] = jnp.zeros_like(out_ref)

    x = x_ref[...]                                           # (tm, d_ff_pad) f32
    h = jnp.dot(x.astype(jnp.bfloat16), w1t_ref[...],
                preferred_element_type=jnp.float32)          # (tm, tj)
    start = pl.multiple_of(j * tj, tj)
    h = jnp.maximum(h + b1_ref[:, pl.ds(start, tj)], 0.0)
    r = (x_ref[:, pl.ds(start, tj)] + h).astype(jnp.bfloat16)
    out_ref[...] += jnp.dot(r, w2t_ref[...],
                            preferred_element_type=jnp.float32)

    @pl.when(j == pl.num_programs(1) - 1)
    def _():
        out_ref[...] += b2_ref[...]


# ---------------------------------------------------------------------------
# Wrapper (per-call: only x is padded here)
# ---------------------------------------------------------------------------
def classification_head(x, params, *, tm_max=256):
    """x: (B, d_ff) f32; params from prepare_classification_head_params."""
    B, d_ff = x.shape
    assert d_ff == params["d_ff"]
    d_ff_pad, tw_pad, tw = params["d_ff_pad"], params["tw_pad"], params["tw"]
    w1t, b1, w2t, b2 = params["w1t"], params["b1"], params["w2t"], params["b2"]

    # Per-generation VMEM accounting.
    vmem_cap = _vmem_capacity_bytes()
    vmem_limit = int(vmem_cap * 0.8)      # ~102 MiB v5e/v6e, ~51 MiB v7x
    budget = int(vmem_limit * 0.6)        # working-set budget (compiler headroom)

    tm = min(tm_max, _round_up(B, 8))

    def fused_cost(tm_):
        return (2 * tm_ * d_ff_pad * 4          # x (double-buffered)
                + 2 * d_ff_pad * d_ff_pad * 2   # W1^T (bf16)
                + 2 * d_ff_pad * tw_pad * 2     # W2^T (bf16)
                + 2 * (d_ff_pad + tw_pad) * 4   # biases
                + 2 * tm_ * tw_pad * 4          # output
                + 2 * tm_ * d_ff_pad * 4)       # h / residual intermediates

    def tiled_cost(tm_, tj_):
        return (2 * tm_ * d_ff_pad * 4          # x (resident across j)
                + 2 * d_ff_pad * tj_ * 2        # W1^T block (bf16)
                + 2 * tj_ * tw_pad * 2          # W2^T block (bf16)
                + 2 * (d_ff_pad + tw_pad) * 4   # biases
                + 2 * tm_ * tw_pad * 4          # output accumulator
                + 2 * tm_ * tj_ * 4)            # h / residual intermediates

    use_fused = fused_cost(tm) <= budget
    tj = 128
    if not use_fused:
        if tiled_cost(tm, 128) > budget:
            for cand in (128, 64, 32, 16, 8):
                if cand < tm and tiled_cost(cand, 128) <= budget:
                    tm = cand
                    break
            else:
                tm = 8
        for cand in (1024, 512, 256, 128):
            if cand <= d_ff_pad and d_ff_pad % cand == 0 and \
               tiled_cost(tm, cand) <= budget:
                tj = cand
                break

    b_pad = _round_up(B, tm)
    n_i = b_pad // tm
    xp = jnp.pad(x.astype(jnp.float32), ((0, b_pad - B), (0, d_ff_pad - d_ff)))

    # Megacore decision: shard the batch axis only when activation traffic
    # dominates weight traffic (otherwise each core would re-stream weights).
    weight_bytes = (d_ff_pad * d_ff_pad + d_ff_pad * tw_pad) * 2
    act_bytes = b_pad * d_ff_pad * 4
    i_sem = "parallel" if (n_i >= 2 and act_bytes >= weight_bytes) else "arbitrary"

    if use_fused:
        out_padded = pl.pallas_call(
            _fused_kernel,
            out_shape=jax.ShapeDtypeStruct((b_pad, tw_pad), jnp.float32),
            grid_spec=pltpu.PrefetchScalarGridSpec(
                num_scalar_prefetch=0,
                grid=(n_i,),
                in_specs=[
                    pl.BlockSpec((tm, d_ff_pad), lambda i: (i, 0)),
                    pl.BlockSpec((d_ff_pad, d_ff_pad), lambda i: (0, 0)),
                    pl.BlockSpec((1, d_ff_pad), lambda i: (0, 0)),
                    pl.BlockSpec((d_ff_pad, tw_pad), lambda i: (0, 0)),
                    pl.BlockSpec((1, tw_pad), lambda i: (0, 0)),
                ],
                out_specs=pl.BlockSpec((tm, tw_pad), lambda i: (i, 0)),
            ),
            compiler_params=pltpu.CompilerParams(
                dimension_semantics=(i_sem,),
                vmem_limit_bytes=vmem_limit),
        )(xp, w1t, b1, w2t, b2)
    else:
        grid = (n_i, d_ff_pad // tj)
        out_padded = pl.pallas_call(
            functools.partial(_tiled_kernel, tj=tj),
            out_shape=jax.ShapeDtypeStruct((b_pad, tw_pad), jnp.float32),
            grid_spec=pltpu.PrefetchScalarGridSpec(
                num_scalar_prefetch=0,
                grid=grid,
                in_specs=[
                    pl.BlockSpec((tm, d_ff_pad), lambda i, j: (i, 0)),
                    pl.BlockSpec((d_ff_pad, tj), lambda i, j: (0, j)),
                    pl.BlockSpec((1, d_ff_pad), lambda i, j: (0, 0)),
                    pl.BlockSpec((tj, tw_pad), lambda i, j: (j, 0)),
                    pl.BlockSpec((1, tw_pad), lambda i, j: (0, 0)),
                ],
                out_specs=pl.BlockSpec((tm, tw_pad), lambda i, j: (i, 0)),
            ),
            compiler_params=pltpu.CompilerParams(
                dimension_semantics=(i_sem, "arbitrary"),
                vmem_limit_bytes=vmem_limit),
        )(xp, w1t, b1, w2t, b2)

    return out_padded[:B, :tw]


# ---------------------------------------------------------------------------
# Deterministic init helpers (matching the PyTorch module's init scheme)
# ---------------------------------------------------------------------------
def _xavier_uniform(key, shape):
    fan_out, fan_in = shape
    a = (6.0 / (fan_in + fan_out)) ** 0.5
    return jax.random.uniform(key, shape, jnp.float32, minval=-a, maxval=a)


def _torch_linear_default(key, out_f, in_f):
    kw, kb = jax.random.split(key)
    bound = 1.0 / (in_f ** 0.5)
    w = jax.random.uniform(kw, (out_f, in_f), jnp.float32, -bound, bound)
    b = jax.random.uniform(kb, (out_f,), jnp.float32, -bound, bound)
    return w, b


if __name__ == "__main__":
    d_ff = 32
    target_window = 16
    batch = 8

    key = jax.random.PRNGKey(0)
    kx, k1, k1b, k2 = jax.random.split(key, 4)

    w1 = _xavier_uniform(k1, (d_ff, d_ff))                    # linear_1.weight
    _, b1 = _torch_linear_default(k1b, d_ff, d_ff)            # linear_1.bias
    w2, b2 = _torch_linear_default(k2, target_window, d_ff)   # linear_2

    x = jax.random.normal(kx, (batch, d_ff), jnp.float32)

    # Parameters are padded / transposed / cast once (load time, not per call).
    params = prepare_classification_head_params(w1, b1, w2, b2)

    out = classification_head(x, params)
    out = jax.block_until_ready(out)
    assert out.shape == (batch, target_window)

    # TODO(synk): dropout (p=0 / eval) is the identity and is omitted.

    # Exact-semantics reference with the same bf16 weight/activation rounding
    # the kernel uses (f32 accumulation) — tight tolerance.
    xb = x.astype(jnp.bfloat16)
    h_bf = jnp.maximum(
        jnp.dot(xb, w1.astype(jnp.bfloat16).T,
                preferred_element_type=jnp.float32) + b1, 0.0)
    r_bf = (x + h_bf).astype(jnp.bfloat16)
    ref_bf = jnp.dot(r_bf, w2.astype(jnp.bfloat16).T,
                     preferred_element_type=jnp.float32) + b2
    assert jnp.allclose(out, ref_bf, atol=5e-3, rtol=5e-3)

    # Full-precision module reference — loose tolerance (bf16 weights).
    h_ref = jnp.maximum(x @ w1.T + b1, 0.0)
    ref = (x + h_ref) @ w2.T + b2
    assert jnp.allclose(out, ref, atol=5e-2, rtol=5e-2)

    print("KERNEL_OK")
</pallas_src>

<mosaic_0001>
module attributes {stable_mosaic.version = 11 : i64} {
  func.func @_fused_kernel(%arg0: i32, %arg1: memref<8x128xf32, #tpu.memory_space<vmem>>, %arg2: memref<128x128xbf16, #tpu.memory_space<vmem>>, %arg3: memref<1x128xf32, #tpu.memory_space<vmem>>, %arg4: memref<128x128xbf16, #tpu.memory_space<vmem>>, %arg5: memref<1x128xf32, #tpu.memory_space<vmem>>, %arg6: memref<8x128xf32, #tpu.memory_space<vmem>>) attributes {dimension_semantics = [#tpu.dimension_semantics<arbitrary>], iteration_bounds = array<i64: 1>, scalar_prefetch = 0 : i64, scratch_operands = 0 : i64, tpu.core_type = #tpu.core_type<tc>, window_params = [{transform_indices = @transform_0, window_bounds = array<i64: 8, 128>}, {pipeline_mode = #tpu.pipeline_mode<synchronous>, transform_indices = @transform_1, window_bounds = array<i64: 128, 128>}, {pipeline_mode = #tpu.pipeline_mode<synchronous>, transform_indices = @transform_2, window_bounds = array<i64: 1, 128>}, {pipeline_mode = #tpu.pipeline_mode<synchronous>, transform_indices = @transform_3, window_bounds = array<i64: 128, 128>}, {pipeline_mode = #tpu.pipeline_mode<synchronous>, transform_indices = @transform_4, window_bounds = array<i64: 1, 128>}, {transform_indices = @transform_5, window_bounds = array<i64: 8, 128>}]} {
    %c0 = arith.constant 0 : index
    %c0_0 = arith.constant 0 : index
    %0 = vector.load %arg1[%c0, %c0_0] : memref<8x128xf32, #tpu.memory_space<vmem>>, vector<8x128xf32>
    %1 = arith.truncf %0 : vector<8x128xf32> to vector<8x128xbf16>
    %c0_1 = arith.constant 0 : index
    %c0_2 = arith.constant 0 : index
    %2 = vector.load %arg2[%c0_1, %c0_2] : memref<128x128xbf16, #tpu.memory_space<vmem>>, vector<128x128xbf16>
    %cst = arith.constant dense<0.000000e+00> : vector<8x128xf32>
    %3 = tpu.matmul %1, %2, %cst {dimension_numbers = #tpu.dot_dimension_numbers<[1], [0], [0], [1], [0, 0, 1, 1], [], []>} : vector<8x128xbf16>, vector<128x128xbf16>, vector<8x128xf32> -> vector<8x128xf32>
    %c0_3 = arith.constant 0 : index
    %c0_4 = arith.constant 0 : index
    %4 = vector.load %arg3[%c0_3, %c0_4] : memref<1x128xf32, #tpu.memory_space<vmem>>, vector<1x128xf32>
    %5 = vector.broadcast %4 : vector<1x128xf32> to vector<8x128xf32>
    %6 = arith.addf %3, %5 : vector<8x128xf32>
    %cst_5 = arith.constant 0.000000e+00 : f32
    %7 = vector.broadcast %cst_5 : f32 to vector<8x128xf32>
    %8 = arith.maximumf %6, %7 : vector<8x128xf32>
    %9 = arith.addf %0, %8 : vector<8x128xf32>
    %10 = arith.truncf %9 : vector<8x128xf32> to vector<8x128xbf16>
    %c0_6 = arith.constant 0 : index
    %c0_7 = arith.constant 0 : index
    %11 = vector.load %arg4[%c0_6, %c0_7] : memref<128x128xbf16, #tpu.memory_space<vmem>>, vector<128x128xbf16>
    %cst_8 = arith.constant dense<0.000000e+00> : vector<8x128xf32>
    %12 = tpu.matmul %10, %11, %cst_8 {dimension_numbers = #tpu.dot_dimension_numbers<[1], [0], [0], [1], [0, 0, 1, 1], [], []>} : vector<8x128xbf16>, vector<128x128xbf16>, vector<8x128xf32> -> vector<8x128xf32>
    %c0_9 = arith.constant 0 : index
    %c0_10 = arith.constant 0 : index
    %13 = vector.load %arg5[%c0_9, %c0_10] : memref<1x128xf32, #tpu.memory_space<vmem>>, vector<1x128xf32>
    %14 = vector.broadcast %13 : vector<1x128xf32> to vector<8x128xf32>
    %15 = arith.addf %12, %14 : vector<8x128xf32>
    %c0_11 = arith.constant 0 : index
    %c0_12 = arith.constant 0 : index
    %16 = vector.load %arg6[%c0_11, %c0_12] : memref<8x128xf32, #tpu.memory_space<vmem>>, vector<8x128xf32>
    tpu.vector_store %arg6[%c0_11, %c0_12], %15 {strides = array<i32>} : memref<8x128xf32, #tpu.memory_space<vmem>>, vector<8x128xf32>,
    return
  }
  func.func @transform_0(%arg0: i32) -> (i32, i32) {
    %c0_i32 = arith.constant 0 : i32
    %c0_i32_0 = arith.constant 0 : i32
    return %arg0, %c0_i32 : i32, i32
  }
  func.func @transform_1(%arg0: i32) -> (i32, i32) {
    %c0_i32 = arith.constant 0 : i32
    %c0_i32_0 = arith.constant 0 : i32
    %c0_i32_1 = arith.constant 0 : i32
    return %c0_i32, %c0_i32_0 : i32, i32
  }
  func.func @transform_2(%arg0: i32) -> (i32, i32) {
    %c0_i32 = arith.constant 0 : i32
    %c0_i32_0 = arith.constant 0 : i32
    %c0_i32_1 = arith.constant 0 : i32
    return %c0_i32, %c0_i32_0 : i32, i32
  }
  func.func @transform_3(%arg0: i32) -> (i32, i32) {
    %c0_i32 = arith.constant 0 : i32
    %c0_i32_0 = arith.constant 0 : i32
    %c0_i32_1 = arith.constant 0 : i32
    return %c0_i32, %c0_i32_0 : i32, i32
  }
  func.func @transform_4(%arg0: i32) -> (i32, i32) {
    %c0_i32 = arith.constant 0 : i32
    %c0_i32_0 = arith.constant 0 : i32
    %c0_i32_1 = arith.constant 0 : i32
    return %c0_i32, %c0_i32_0 : i32, i32
  }
  func.func @transform_5(%arg0: i32) -> (i32, i32) {
    %c0_i32 = arith.constant 0 : i32
    %c0_i32_0 = arith.constant 0 : i32
    return %arg0, %c0_i32 : i32, i32
  }
}

</mosaic_0001>

<llo_original>
// kernel: tpu_custom_call.1
$region0: #{tpu_custom_call.1}
  #allocation0 [shape = 'u32[]', space=smem, size = 0x4, offset = 0x4, fixed_abs, tag = 'smem constant byte address 0x4 - core index']
  #allocation1 [shape = 'u32[144,128]{1,0:T(1,128)}', space=vmem, size = 0x12000, scoped, tag = 'internal scratch']
  %s0 = inlined_call_operand.hbm [shape: f32[8,128], index: 0, kind: input, shape index: {}]
  %s1 = inlined_call_operand.hbm [shape: bf16[128,128], index: 1, kind: input, shape index: {}]
  %s2 = inlined_call_operand.vmem [shape: f32[1,128], index: 2, kind: input, shape index: {}]
  %s3 = inlined_call_operand.hbm [shape: bf16[128,128], index: 3, kind: input, shape index: {}]
  %s4 = inlined_call_operand.vmem [shape: f32[1,128], index: 4, kind: input, shape index: {}]
  %s5 = inlined_call_operand.hbm [shape: f32[8,128], index: 5, kind: output, shape index: {}]
  %s6 = sld [smem:[#allocation0]]
  $region42: #{tpu_custom_call.1} parent=0
    _
  %s8 = ssub.s32 1, %s6
  %s9 = scalar_select 0, %s8, %s6
  $region1: #{tpu_custom_call.1} parent=0
    #allocation2 [shape = 'u8[4096]{0}', space=vmem, size = 0x1000, scoped, tag = 'input window, operand 0, single buffered']
    #allocation3 [shape = 's32[1]{0}', space=sflag, size = 0x4, scoped, tag = 'scoped memory for tpu_custom_call.1']
    #allocation4 [shape = 's32[1]{0}', space=sflag, size = 0x4, scoped, tag = 'scoped memory for tpu_custom_call.1']
    #allocation5 [shape = 'u8[32768]{0}', space=vmem, size = 0x8000, scoped, tag = 'input window, operand 1, single buffered']
    #allocation6 [shape = 's32[1]{0}', space=sflag, size = 0x4, scoped, tag = 'scoped memory for tpu_custom_call.1']
    #allocation7 [shape = 'u8[32768]{0}', space=vmem, size = 0x8000, scoped, tag = 'input window, operand 3, single buffered']
    #allocation8 [shape = 'u8[4096]{0}', space=vmem, size = 0x1000, scoped, tag = 'output window, operand 0, single buffered']
    %10 = vsyncpa [#allocation3], 0
    %11 = vsyncpa [#allocation6], 0
    %12 = vsyncpa [#allocation4], 0
    // Predicated region
    $region2: #{tpu_custom_call.1} parent=1 // pred_check
      _
    $region3: #{tpu_custom_call.1} parent=1 // pred_check_branch
      %14 = sbr.rel (0) target = $region5
    $region4: #{tpu_custom_call.1} parent=1 // pred_region
      %s16 = ssub.s32 128, 128
      %17 = vsyncadd [#allocation3], %s16
      %s19 = sshll.u32 [#allocation2], 4
      %s20 = int_to_ptr.vmem [resolvable:$true] %s19
      %22 = dma.hbm_to_vmem [thread:$0]  %s0, 128, %s20, [#allocation3]
    $region5: #{tpu_custom_call.1} parent=1 // pred_fallthru
      _
    // Predicated region
    $region6: #{tpu_custom_call.1} parent=1 // pred_check
      _
    $region7: #{tpu_custom_call.1} parent=1 // pred_check_branch
      %24 = sbr.rel (0) target = $region9
    $region8: #{tpu_custom_call.1} parent=1 // pred_region
      %s26 = ssub.s32 1024, 1024
      %27 = vsyncadd [#allocation6], %s26
      %s28 = sshll.u32 [#allocation5], 4
      %s29 = int_to_ptr.vmem [resolvable:$true] %s28
      %34 = dma.hbm_to_vmem [thread:$0]  %s1, 1024, %s29, [#allocation6], 64, 64, 4
    $region9: #{tpu_custom_call.1} parent=1 // pred_fallthru
      _
    // Predicated region
    $region10: #{tpu_custom_call.1} parent=1 // pred_check
      _
    $region11: #{tpu_custom_call.1} parent=1 // pred_check_branch
      %36 = sbr.rel (0) target = $region13
    $region12: #{tpu_custom_call.1} parent=1 // pred_region
      _
    $region13: #{tpu_custom_call.1} parent=1 // pred_fallthru
      _
    // Predicated region
    $region14: #{tpu_custom_call.1} parent=1 // pred_check
      _
    $region15: #{tpu_custom_call.1} parent=1 // pred_check_branch
      %38 = sbr.rel (0) target = $region17
    $region16: #{tpu_custom_call.1} parent=1 // pred_region
      %s40 = ssub.s32 1024, 1024
      %41 = vsyncadd [#allocation6], %s40
      %s42 = sshll.u32 [#allocation7], 4
      %s43 = int_to_ptr.vmem [resolvable:$true] %s42
      %48 = dma.hbm_to_vmem [thread:$0]  %s3, 1024, %s43, [#allocation6], 64, 64, 4
    $region17: #{tpu_custom_call.1} parent=1 // pred_fallthru
      _
    // Predicated region
    $region18: #{tpu_custom_call.1} parent=1 // pred_check
      _
    $region19: #{tpu_custom_call.1} parent=1 // pred_check_branch
      %50 = sbr.rel (0) target = $region21
    $region20: #{tpu_custom_call.1} parent=1 // pred_region
      _
    $region21: #{tpu_custom_call.1} parent=1 // pred_fallthru
      _
    // Predicated region
    $region22: #{tpu_custom_call.1} parent=1 // pred_check
      _
    $region23: #{tpu_custom_call.1} parent=1 // pred_check_branch
      %52 = sbr.rel (0) target = $region25
    $region24: #{tpu_custom_call.1} parent=1 // pred_region
      %53 = dma.done [#allocation3], 128
    $region25: #{tpu_custom_call.1} parent=1 // pred_fallthru
      _
    // Predicated region
    $region26: #{tpu_custom_call.1} parent=1 // pred_check
      _
    $region27: #{tpu_custom_call.1} parent=1 // pred_check_branch
      %55 = sbr.rel (0) target = $region29
    $region28: #{tpu_custom_call.1} parent=1 // pred_region
      %56 = dma.done [#allocation6], 1024
    $region29: #{tpu_custom_call.1} parent=1 // pred_fallthru
      _
    // Predicated region
    $region30: #{tpu_custom_call.1} parent=1 // pred_check
      _
    $region31: #{tpu_custom_call.1} parent=1 // pred_check_branch
      %58 = sbr.rel (0) target = $region33
    $region32: #{tpu_custom_call.1} parent=1 // pred_region
      %59 = dma.done [#allocation6], 1024
    $region33: #{tpu_custom_call.1} parent=1 // pred_fallthru
      _
    %v61 = vld [vmem:[#allocation2] sm:$0xff]
    %v62 = vpack.c.bf16 %v61, %v61
    %v63 = vld [vmem:[#allocation5] sm:$0xf]
    %v64 = vld [vmem:[#allocation5 + $0x4] sm:$0xf]
    %v65 = vld [vmem:[#allocation5 + $0x8] sm:$0xf]
    %v66 = vld [vmem:[#allocation5 + $0xc] sm:$0xf]
    %v67 = vld [vmem:[#allocation5 + $0x10] sm:$0xf]
    %v68 = vld [vmem:[#allocation5 + $0x14] sm:$0xf]
    %v69 = vld [vmem:[#allocation5 + $0x18] sm:$0xf]
    %v70 = vld [vmem:[#allocation5 + $0x1c] sm:$0xf]
    %v71 = vld [vmem:[#allocation5 + $0x20] sm:$0xf]
    %v72 = vld [vmem:[#allocation5 + $0x24] sm:$0xf]
    %v73 = vld [vmem:[#allocation5 + $0x28] sm:$0xf]
    %v74 = vld [vmem:[#allocation5 + $0x2c] sm:$0xf]
    %v75 = vld [vmem:[#allocation5 + $0x30] sm:$0xf]
    %v76 = vld [vmem:[#allocation5 + $0x34] sm:$0xf]
    %v77 = vld [vmem:[#allocation5 + $0x38] sm:$0xf]
    %v78 = vld [vmem:[#allocation5 + $0x3c] sm:$0xf]
    %v79 = vld [vmem:[%s2] sm:$0x1]
    %v81 = vlaneseq
    %v82 = vshrl.u32 %v81, 7
    %v83 = vsub.s32 0, %v82
    %v84 = vrot.slane %v79, %v83
    %v102 = vunpack.c.l.b16 %v63
    %v103 = vunpack.c.l.b16 %v64
    %v104 = vunpack.c.l.b16 %v65
    %v105 = vunpack.c.l.b16 %v66
    %v106 = vunpack.c.l.b16 %v67
    %v107 = vunpack.c.l.b16 %v68
    %v108 = vunpack.c.l.b16 %v69
    %v109 = vunpack.c.l.b16 %v70
    %v110 = vunpack.c.l.b16 %v71
    %v111 = vunpack.c.l.b16 %v72
    %v112 = vunpack.c.l.b16 %v73
    %v113 = vunpack.c.l.b16 %v74
    %v114 = vunpack.c.l.b16 %v75
    %v115 = vunpack.c.l.b16 %v76
    %v116 = vunpack.c.l.b16 %v77
    %v117 = vunpack.c.l.b16 %v78
    %v118 = vpack.c.b16 %v103, %v102
    %v119 = vpack.c.b16 %v105, %v104
    %v120 = vpack.c.b16 %v107, %v106
    %v121 = vpack.c.b16 %v109, %v108
    %v122 = vpack.c.b16 %v111, %v110
    %v123 = vpack.c.b16 %v113, %v112
    %v124 = vpack.c.b16 %v115, %v114
    %v125 = vpack.c.b16 %v117, %v116
    %134 = vmatprep.subr.bf16.mxu0 0
    %135 = vmatpush1.bf16.msra.mxu0 %v118
    %136 = vmatprep.subr.bf16.mxu0 0
    %137 = vmatpush1.bf16.msra.mxu0 %v119
    %138 = vmatprep.subr.bf16.mxu0 0
    %139 = vmatpush1.bf16.msra.mxu0 %v120
    %140 = vmatprep.subr.bf16.mxu0 0
    %141 = vmatpush1.bf16.msra.mxu0 %v121
    %142 = vmatprep.subr.bf16.mxu0 0
    %143 = vmatpush1.bf16.msra.mxu0 %v122
    %144 = vmatprep.subr.bf16.mxu0 0
    %145 = vmatpush1.bf16.msra.mxu0 %v123
    %146 = vmatprep.subr.bf16.mxu0 0
    %147 = vmatpush1.bf16.msra.mxu0 %v124
    %148 = vmatprep.subr.bf16.mxu0 0
    %149 = vmatpush1.bf16.msra.mxu0 %v125
    %150 = vmatprep.subr.bf16.mxu0 0
    %151 = vmatpush1.bf16.msra.mxu0 0
    %152 = vmatprep.subr.bf16.mxu0 0
    %153 = vmatpush1.bf16.msra.mxu0 0
    %154 = vmatprep.subr.bf16.mxu0 0
    %155 = vmatpush1.bf16.msra.mxu0 0
    %156 = vmatprep.subr.bf16.mxu0 0
    %157 = vmatpush1.bf16.msra.mxu0 0
    %158 = vmatprep.subr.bf16.mxu0 0
    %159 = vmatpush1.bf16.msra.mxu0 0
    %160 = vmatprep.subr.bf16.mxu0 0
    %161 = vmatpush1.bf16.msra.mxu0 0
    %162 = vmatprep.subr.bf16.mxu0 0
    %163 = vmatpush1.bf16.msra.mxu0 0
    %164 = vmatprep.subr.bf16.mxu0 0
    %165 = vmatpush1.bf16.msra.mxu0 0
    %166 = vmatprep.mubr.bf16.mxu0 0
    %167 = vmatmul.mubr.bf16.gmra.mrb[0].mxu0 %v62
    %v168 = vpop.f32.mrb[0].mxu0
    %v169 = vadd.f32 %v84, %v168
    %v170 = vpop.f32.mrb[0].mxu0
    %v171 = vpop.f32.mrb[0].mxu0
    %v172 = vpop.f32.mrb[0].mxu0
    %173 = vdwg.mxu0
    %v174 = vmax.f32 %v169, 0.0
    %v175 = vadd.f32 %v61, %v174
    %v176 = vpack.c.bf16 %v175, %v175
    %v177 = vld [vmem:[#allocation7] sm:$0xf]
    %v178 = vld [vmem:[#allocation7 + $0x4] sm:$0xf]
    %v179 = vld [vmem:[#allocation7 + $0x8] sm:$0xf]
    %v180 = vld [vmem:[#allocation7 + $0xc] sm:$0xf]
    %v181 = vld [vmem:[#allocation7 + $0x10] sm:$0xf]
    %v182 = vld [vmem:[#allocation7 + $0x14] sm:$0xf]
    %v183 = vld [vmem:[#allocation7 + $0x18] sm:$0xf]
    %v184 = vld [vmem:[#allocation7 + $0x1c] sm:$0xf]
    %v185 = vld [vmem:[#allocation7 + $0x20] sm:$0xf]
    %v186 = vld [vmem:[#allocation7 + $0x24] sm:$0xf]
    %v187 = vld [vmem:[#allocation7 + $0x28] sm:$0xf]
    %v188 = vld [vmem:[#allocation7 + $0x2c] sm:$0xf]
    %v189 = vld [vmem:[#allocation7 + $0x30] sm:$0xf]
    %v190 = vld [vmem:[#allocation7 + $0x34] sm:$0xf]
    %v191 = vld [vmem:[#allocation7 + $0x38] sm:$0xf]
    %v192 = vld [vmem:[#allocation7 + $0x3c] sm:$0xf]
    %v193 = vld [vmem:[%s4] sm:$0x1]
    %v195 = vlaneseq
    %v196 = vshrl.u32 %v195, 7
    %v197 = vsub.s32 0, %v196
    %v198 = vrot.slane %v193, %v197
    %v216 = vunpack.c.l.b16 %v177
    %v217 = vunpack.c.l.b16 %v178
    %v218 = vunpack.c.l.b16 %v179
    %v219 = vunpack.c.l.b16 %v180
    %v220 = vunpack.c.l.b16 %v181
    %v221 = vunpack.c.l.b16 %v182
    %v222 = vunpack.c.l.b16 %v183
    %v223 = vunpack.c.l.b16 %v184
    %v224 = vunpack.c.l.b16 %v185
    %v225 = vunpack.c.l.b16 %v186
    %v226 = vunpack.c.l.b16 %v187
    %v227 = vunpack.c.l.b16 %v188
    %v228 = vunpack.c.l.b16 %v189
    %v229 = vunpack.c.l.b16 %v190
    %v230 = vunpack.c.l.b16 %v191
    %v231 = vunpack.c.l.b16 %v192
    %v232 = vpack.c.b16 %v217, %v216
    %v233 = vpack.c.b16 %v219, %v218
    %v234 = vpack.c.b16 %v221, %v220
    %v235 = vpack.c.b16 %v223, %v222
    %v236 = vpack.c.b16 %v225, %v224
    %v237 = vpack.c.b16 %v227, %v226
    %v238 = vpack.c.b16 %v229, %v228
    %v239 = vpack.c.b16 %v231, %v230
    %248 = vmatprep.subr.bf16.mxu0 0
    %249 = vmatpush1.bf16.msra.mxu0 %v232
    %250 = vmatprep.subr.bf16.mxu0 0
    %251 = vmatpush1.bf16.msra.mxu0 %v233
    %252 = vmatprep.subr.bf16.mxu0 0
    %253 = vmatpush1.bf16.msra.mxu0 %v234
    %254 = vmatprep.subr.bf16.mxu0 0
    %255 = vmatpush1.bf16.msra.mxu0 %v235
    %256 = vmatprep.subr.bf16.mxu0 0
    %257 = vmatpush1.bf16.msra.mxu0 %v236
    %258 = vmatprep.subr.bf16.mxu0 0
    %259 = vmatpush1.bf16.msra.mxu0 %v237
    %260 = vmatprep.subr.bf16.mxu0 0
    %261 = vmatpush1.bf16.msra.mxu0 %v238
    %262 = vmatprep.subr.bf16.mxu0 0
    %263 = vmatpush1.bf16.msra.mxu0 %v239
    %264 = vmatprep.subr.bf16.mxu0 0
    %265 = vmatpush1.bf16.msra.mxu0 0
    %266 = vmatprep.subr.bf16.mxu0 0
    %267 = vmatpush1.bf16.msra.mxu0 0
    %268 = vmatprep.subr.bf16.mxu0 0
    %269 = vmatpush1.bf16.msra.mxu0 0
    %270 = vmatprep.subr.bf16.mxu0 0
    %271 = vmatpush1.bf16.msra.mxu0 0
    %272 = vmatprep.subr.bf16.mxu0 0
    %273 = vmatpush1.bf16.msra.mxu0 0
    %274 = vmatprep.subr.bf16.mxu0 0
    %275 = vmatpush1.bf16.msra.mxu0 0
    %276 = vmatprep.subr.bf16.mxu0 0
    %277 = vmatpush1.bf16.msra.mxu0 0
    %278 = vmatprep.subr.bf16.mxu0 0
    %279 = vmatpush1.bf16.msra.mxu0 0
    %280 = vmatprep.mubr.bf16.mxu0 0
    %281 = vmatmul.mubr.bf16.gmra.mrb[0].mxu0 %v176
    %v282 = vpop.f32.mrb[0].mxu0
    %v283 = vadd.f32 %v198, %v282
    %v284 = vpop.f32.mrb[0].mxu0
    %v285 = vpop.f32.mrb[0].mxu0
    %v286 = vpop.f32.mrb[0].mxu0
    %287 = vdwg.mxu0
    %288 = vst [vmem:[#allocation8] sm:$0xff] %v283
    // Predicated region
    $region34: #{tpu_custom_call.1} parent=1 // pred_check
      _
    $region35: #{tpu_custom_call.1} parent=1 // pred_check_branch
      %290 = sbr.rel (0) target = $region37
    $region36: #{tpu_custom_call.1} parent=1 // pred_region
      %s292 = ssub.s32 128, 128
      %293 = vsyncadd [#allocation4], %s292
      %s295 = sshll.u32 [#allocation8], 4
      %s296 = int_to_ptr.vmem [resolvable:$true] %s295
      %298 = dma.vmem_to_hbm [thread:$0]  %s296, 128, %s5, [#allocation4]
    $region37: #{tpu_custom_call.1} parent=1 // pred_fallthru
      _
    // Predicated region
    $region38: #{tpu_custom_call.1} parent=1 // pred_check
      _
    $region39: #{tpu_custom_call.1} parent=1 // pred_check_branch
      %300 = sbr.rel (0) target = $region41
    $region40: #{tpu_custom_call.1} parent=1 // pred_region
      %301 = dma.done [#allocation4], 128
    $region41: #{tpu_custom_call.1} parent=1 // pred_fallthru
      _
    %302 = vsyncpa [#allocation3], 1
    %303 = vsyncpa [#allocation6], 1
    %304 = vsyncpa [#allocation4], 1

</llo_original>
